<compile_context>
chip_gen: v7x
topology: tpu7x:2x2x1
jax: 0.10.0
libtpu: 0.0.40
codegen_flags: <defaults>
</compile_context>

<pallas_src>
import functools

import jax
import jax.numpy as jnp
import numpy as np
from jax import lax
from jax.experimental import pallas as pl
from jax.experimental.pallas import tpu as pltpu


def _discriminator_kernel(x_ref, w_ref, b_ref, m_ref, o_ref, patch_ref, *,
                          num_layers, sub, taps):
    """One grid step = one folded group of images.

    x_ref:     (1, sub, HW)      activations, sub = images_per_step * C
    w_ref:     (L, sub, 9*sub)   per-layer block-diagonal conv weights
    b_ref:     (L, sub, 1)       per-layer bias (tiled per image in the group)
    m_ref:     (9, sub, HW)      per-tap zero-padding masks (f32 0/1)
    o_ref:     (1, sub, HW)      output
    patch_ref: (9*sub, HW)       VMEM scratch im2col patch
    """
    act = x_ref[0].astype(jnp.float32)                       # (sub, HW) full tile
    for l in range(num_layers):
        # Build the im2col patch tap-by-tap into tile-aligned scratch slabs
        # (each slab is a whole 8-sublane tile -> no sublane repacking).
        for t, (shift, needs_mask) in enumerate(taps):
            shifted = act if shift == 0 else pltpu.roll(act, shift, axis=1)
            if needs_mask:
                shifted = shifted * m_ref[t]                  # one vmul per vreg
            patch_ref[t * sub:(t + 1) * sub, :] = shifted
        # One (sub, 9*sub) x (9*sub, HW) MXU matmul covers the conv for the
        # whole folded group; block-diagonal weights keep images independent.
        conv = jnp.dot(w_ref[l], patch_ref[...],
                       preferred_element_type=jnp.float32)    # (sub, HW)
        act = act + jnp.maximum(conv + b_ref[l], 0.0)         # ReLU + residual
    # Sigmoid epilogue on the EUP: sigmoid(x) = 0.5 * (tanh(x/2) + 1).
    o_ref[0] = (0.5 * (jnp.tanh(0.5 * act) + 1.0)).astype(o_ref.dtype)


@functools.lru_cache(maxsize=None)
def _tap_tables(H, W, sub):
    """Static per-tap lane shifts and SAME zero-padding validity masks."""
    HW = H * W
    yy, xx = np.divmod(np.arange(HW), W)
    taps = []
    masks = np.empty((9, sub, HW), np.float32)
    for t in range(9):
        dy, dx = t // 3 - 1, t % 3 - 1
        off = dy * W + dx                      # neighbour offset in flat HW
        valid = np.ones(HW, dtype=bool)
        if dy == -1:
            valid &= yy >= 1
        elif dy == 1:
            valid &= yy <= H - 2
        if dx == -1:
            valid &= xx >= 1
        elif dx == 1:
            valid &= xx <= W - 2
        masks[t] = np.broadcast_to(valid.astype(np.float32), (sub, HW))
        # roll(act, (-off) % HW)[p] == act[(p + off) % HW]; wrap-around lanes
        # are zeroed by the mask, reproducing zero padding.
        taps.append(((-off) % HW, off != 0))
    return tuple(taps), masks


def default_images_per_step(in_channels):
    # Fill all 8 f32 sublanes of a vreg: C=4 -> fold 2 images per grid step.
    # On v7x with a tiny batch you may prefer a smaller value to keep >= 2
    # parallel grid steps (2 TensorCores per chip).
    return max(1, 8 // in_channels)


def init_discriminator_params(key, num_channels):
    """Deterministic init matching nn.Conv2d: weight (Cout, Cin, 3, 3), bias (Cout,)."""
    params = []
    for i in range(len(num_channels) - 1):
        cin, cout = num_channels[i], num_channels[i + 1]
        key, kw, kb = jax.random.split(key, 3)
        bound = 1.0 / np.sqrt(cin * 3 * 3)
        w = jax.random.uniform(kw, (cout, cin, 3, 3), jnp.float32, -bound, bound)
        b = jax.random.uniform(kb, (cout,), jnp.float32, -bound, bound)
        params.append((w, b))
    return params


def pack_discriminator_params(params, images_per_step):
    """Pack conv weights into per-layer block-diagonal (G*C, 9*G*C) matrices.

    Done ONCE at init time (not per forward). Row r = g*C + cout, column
    col = tap*G*C + g*C + cin; off-diagonal (cross-image) blocks are zero.
    """
    C = params[0][0].shape[0]
    G = images_per_step
    sub = G * C
    L = len(params)
    w_big = np.zeros((L, sub, 9 * sub), np.float32)
    b_big = np.zeros((L, sub, 1), np.float32)
    for l, (w, b) in enumerate(params):
        w_np = np.asarray(w)                  # (Cout, Cin, 3, 3)
        b_np = np.asarray(b)
        assert w_np.shape == (C, C, 3, 3) and b_np.shape == (C,), \
            "residual block requires in_channels == out_channels"
        for t in range(9):
            ky, kx = t // 3, t % 3
            for g in range(G):
                r0 = g * C
                c0 = t * sub + g * C
                w_big[l, r0:r0 + C, c0:c0 + C] = w_np[:, :, ky, kx]
        b_big[l, :, 0] = np.tile(b_np, G)
    return jnp.asarray(w_big), jnp.asarray(b_big)


def discriminator_forward(x_nchw, w_big, b_big, images_per_step):
    """x_nchw: (N, C, H, W). w_big/b_big: output of pack_discriminator_params."""
    N, C, H, W = x_nchw.shape
    G = images_per_step
    sub = G * C
    HW = H * W
    L = w_big.shape[0]
    assert w_big.shape == (L, sub, 9 * sub) and b_big.shape == (L, sub, 1)

    # Fold G images' channels onto the sublane axis (pad batch if needed).
    pad = (-N) % G
    x_flat = x_nchw.reshape(N, C, HW)
    if pad:
        x_flat = jnp.concatenate(
            [x_flat, jnp.zeros((pad, C, HW), x_flat.dtype)], axis=0)
    steps = (N + pad) // G
    x_grp = x_flat.reshape(steps, sub, HW)

    taps, masks_np = _tap_tables(H, W, sub)    # host-side, cached
    masks = jnp.asarray(masks_np)

    kernel = functools.partial(_discriminator_kernel,
                               num_layers=L, sub=sub, taps=taps)

    out_grp = pl.pallas_call(
        kernel,
        out_shape=jax.ShapeDtypeStruct((steps, sub, HW), x_nchw.dtype),
        grid=(steps,),
        in_specs=[
            pl.BlockSpec((1, sub, HW), lambda n: (n, 0, 0)),       # activations
            pl.BlockSpec((L, sub, 9 * sub), lambda n: (0, 0, 0)),  # weights (resident)
            pl.BlockSpec((L, sub, 1), lambda n: (0, 0, 0)),        # bias (resident)
            pl.BlockSpec((9, sub, HW), lambda n: (0, 0, 0)),       # tap masks (resident)
        ],
        out_specs=pl.BlockSpec((1, sub, HW), lambda n: (n, 0, 0)),
        scratch_shapes=[pltpu.VMEM((9 * sub, HW), jnp.float32)],   # im2col patch
        compiler_params=pltpu.CompilerParams(
            dimension_semantics=("parallel",)),
    )(x_grp, w_big, b_big, masks)

    out = out_grp.reshape(steps * G, C, HW)[:N]
    return out.reshape(N, C, H, W)


def _reference_forward(x_nchw, params):
    """Pure-JAX reference (matches the PyTorch module)."""
    out = x_nchw
    for (w, b) in params:
        conv = lax.conv_general_dilated(
            out, w, window_strides=(1, 1), padding="SAME",
            dimension_numbers=("NCHW", "OIHW", "NCHW"))
        out = out + jnp.maximum(conv + b[None, :, None, None], 0.0)
    return jax.nn.sigmoid(out)


if __name__ == "__main__":
    key = jax.random.PRNGKey(0)
    # Residual add requires in_channels == out_channels (as in the PyTorch module).
    num_channels = [4, 4, 4]

    key, kx = jax.random.split(key)
    x = jax.random.normal(kx, (2, num_channels[0], 16, 16), jnp.float32)  # NCHW

    params = init_discriminator_params(key, num_channels)
    G = default_images_per_step(num_channels[0])              # 2 -> (8, 256) tiles
    w_big, b_big = pack_discriminator_params(params, G)       # packed once

    out = discriminator_forward(x, w_big, b_big, G)
    out = jax.block_until_ready(out)

    ref = _reference_forward(x, params)
    assert out.shape == x.shape
    assert bool(jnp.all(jnp.isfinite(out)))
    assert np.allclose(np.asarray(out), np.asarray(ref), atol=1e-5, rtol=1e-5)

    print("KERNEL_OK")
</pallas_src>

<mosaic_0001>
module attributes {stable_mosaic.version = 11 : i64} {
  func.func @_discriminator_kernel(%arg0: i32, %arg1: memref<1x8x256xf32, #tpu.memory_space<vmem>>, %arg2: memref<2x8x72xf32, #tpu.memory_space<vmem>>, %arg3: memref<2x8x1xf32, #tpu.memory_space<vmem>>, %arg4: memref<9x8x256xf32, #tpu.memory_space<vmem>>, %arg5: memref<1x8x256xf32, #tpu.memory_space<vmem>>, %arg6: memref<72x256xf32, #tpu.memory_space<vmem>>) attributes {dimension_semantics = [#tpu.dimension_semantics<parallel>], iteration_bounds = array<i64: 1>, scalar_prefetch = 0 : i64, scratch_operands = 1 : i64, tpu.core_type = #tpu.core_type<tc>, window_params = [{transform_indices = @transform_0, window_bounds = array<i64: 1, 8, 256>}, {pipeline_mode = #tpu.pipeline_mode<synchronous>, transform_indices = @transform_1, window_bounds = array<i64: 2, 8, 72>}, {pipeline_mode = #tpu.pipeline_mode<synchronous>, transform_indices = @transform_2, window_bounds = array<i64: 2, 8, 1>}, {pipeline_mode = #tpu.pipeline_mode<synchronous>, transform_indices = @transform_3, window_bounds = array<i64: 9, 8, 256>}, {transform_indices = @transform_4, window_bounds = array<i64: 1, 8, 256>}]} {
    %c0 = arith.constant 0 : index
    %c0_0 = arith.constant 0 : index
    %c0_1 = arith.constant 0 : index
    %0 = vector.load %arg1[%c0, %c0_0, %c0_1] : memref<1x8x256xf32, #tpu.memory_space<vmem>>, vector<1x8x256xf32>
    %1 = vector.shape_cast %0 : vector<1x8x256xf32> to vector<8x256xf32>
    %c17_i32 = arith.constant 17 : i32
    %2 = tpu.dynamic_rotate %1 by %c17_i32 dim 1 : vector<8x256xf32>, i32 -> vector<8x256xf32>
    %c0_2 = arith.constant 0 : index
    %c0_3 = arith.constant 0 : index
    %c0_4 = arith.constant 0 : index
    %3 = vector.load %arg4[%c0_2, %c0_3, %c0_4] : memref<9x8x256xf32, #tpu.memory_space<vmem>>, vector<1x8x256xf32>
    %4 = vector.shape_cast %3 : vector<1x8x256xf32> to vector<8x256xf32>
    %5 = arith.mulf %2, %4 : vector<8x256xf32>
    %c0_5 = arith.constant 0 : index
    %c0_6 = arith.constant 0 : index
    %6 = vector.load %arg6[%c0_5, %c0_6] : memref<72x256xf32, #tpu.memory_space<vmem>>, vector<8x256xf32>
    tpu.vector_store %arg6[%c0_5, %c0_6], %5 {strides = array<i32>} : memref<72x256xf32, #tpu.memory_space<vmem>>, vector<8x256xf32>,
    %c16_i32 = arith.constant 16 : i32
    %7 = tpu.dynamic_rotate %1 by %c16_i32 dim 1 : vector<8x256xf32>, i32 -> vector<8x256xf32>
    %c1 = arith.constant 1 : index
    %c0_7 = arith.constant 0 : index
    %c0_8 = arith.constant 0 : index
    %8 = vector.load %arg4[%c1, %c0_7, %c0_8] : memref<9x8x256xf32, #tpu.memory_space<vmem>>, vector<1x8x256xf32>
    %9 = vector.shape_cast %8 : vector<1x8x256xf32> to vector<8x256xf32>
    %10 = arith.mulf %7, %9 : vector<8x256xf32>
    %c8 = arith.constant 8 : index
    %c0_9 = arith.constant 0 : index
    %11 = vector.load %arg6[%c8, %c0_9] : memref<72x256xf32, #tpu.memory_space<vmem>>, vector<8x256xf32>
    tpu.vector_store %arg6[%c8, %c0_9], %10 {strides = array<i32>} : memref<72x256xf32, #tpu.memory_space<vmem>>, vector<8x256xf32>,
    %c15_i32 = arith.constant 15 : i32
    %12 = tpu.dynamic_rotate %1 by %c15_i32 dim 1 : vector<8x256xf32>, i32 -> vector<8x256xf32>
    %c2 = arith.constant 2 : index
    %c0_10 = arith.constant 0 : index
    %c0_11 = arith.constant 0 : index
    %13 = vector.load %arg4[%c2, %c0_10, %c0_11] : memref<9x8x256xf32, #tpu.memory_space<vmem>>, vector<1x8x256xf32>
    %14 = vector.shape_cast %13 : vector<1x8x256xf32> to vector<8x256xf32>
    %15 = arith.mulf %12, %14 : vector<8x256xf32>
    %c16 = arith.constant 16 : index
    %c0_12 = arith.constant 0 : index
    %16 = vector.load %arg6[%c16, %c0_12] : memref<72x256xf32, #tpu.memory_space<vmem>>, vector<8x256xf32>
    tpu.vector_store %arg6[%c16, %c0_12], %15 {strides = array<i32>} : memref<72x256xf32, #tpu.memory_space<vmem>>, vector<8x256xf32>,
    %c1_i32 = arith.constant 1 : i32
    %17 = tpu.dynamic_rotate %1 by %c1_i32 dim 1 : vector<8x256xf32>, i32 -> vector<8x256xf32>
    %c3 = arith.constant 3 : index
    %c0_13 = arith.constant 0 : index
    %c0_14 = arith.constant 0 : index
    %18 = vector.load %arg4[%c3, %c0_13, %c0_14] : memref<9x8x256xf32, #tpu.memory_space<vmem>>, vector<1x8x256xf32>
    %19 = vector.shape_cast %18 : vector<1x8x256xf32> to vector<8x256xf32>
    %20 = arith.mulf %17, %19 : vector<8x256xf32>
    %c24 = arith.constant 24 : index
    %c0_15 = arith.constant 0 : index
    %21 = vector.load %arg6[%c24, %c0_15] : memref<72x256xf32, #tpu.memory_space<vmem>>, vector<8x256xf32>
    tpu.vector_store %arg6[%c24, %c0_15], %20 {strides = array<i32>} : memref<72x256xf32, #tpu.memory_space<vmem>>, vector<8x256xf32>,
    %c32 = arith.constant 32 : index
    %c0_16 = arith.constant 0 : index
    %22 = vector.load %arg6[%c32, %c0_16] : memref<72x256xf32, #tpu.memory_space<vmem>>, vector<8x256xf32>
    tpu.vector_store %arg6[%c32, %c0_16], %1 {strides = array<i32>} : memref<72x256xf32, #tpu.memory_space<vmem>>, vector<8x256xf32>,
    %c255_i32 = arith.constant 255 : i32
    %23 = tpu.dynamic_rotate %1 by %c255_i32 dim 1 : vector<8x256xf32>, i32 -> vector<8x256xf32>
    %c5 = arith.constant 5 : index
    %c0_17 = arith.constant 0 : index
    %c0_18 = arith.constant 0 : index
    %24 = vector.load %arg4[%c5, %c0_17, %c0_18] : memref<9x8x256xf32, #tpu.memory_space<vmem>>, vector<1x8x256xf32>
    %25 = vector.shape_cast %24 : vector<1x8x256xf32> to vector<8x256xf32>
    %26 = arith.mulf %23, %25 : vector<8x256xf32>
    %c40 = arith.constant 40 : index
    %c0_19 = arith.constant 0 : index
    %27 = vector.load %arg6[%c40, %c0_19] : memref<72x256xf32, #tpu.memory_space<vmem>>, vector<8x256xf32>
    tpu.vector_store %arg6[%c40, %c0_19], %26 {strides = array<i32>} : memref<72x256xf32, #tpu.memory_space<vmem>>, vector<8x256xf32>,
    %c241_i32 = arith.constant 241 : i32
    %28 = tpu.dynamic_rotate %1 by %c241_i32 dim 1 : vector<8x256xf32>, i32 -> vector<8x256xf32>
    %c6 = arith.constant 6 : index
    %c0_20 = arith.constant 0 : index
    %c0_21 = arith.constant 0 : index
    %29 = vector.load %arg4[%c6, %c0_20, %c0_21] : memref<9x8x256xf32, #tpu.memory_space<vmem>>, vector<1x8x256xf32>
    %30 = vector.shape_cast %29 : vector<1x8x256xf32> to vector<8x256xf32>
    %31 = arith.mulf %28, %30 : vector<8x256xf32>
    %c48 = arith.constant 48 : index
    %c0_22 = arith.constant 0 : index
    %32 = vector.load %arg6[%c48, %c0_22] : memref<72x256xf32, #tpu.memory_space<vmem>>, vector<8x256xf32>
    tpu.vector_store %arg6[%c48, %c0_22], %31 {strides = array<i32>} : memref<72x256xf32, #tpu.memory_space<vmem>>, vector<8x256xf32>,
    %c240_i32 = arith.constant 240 : i32
    %33 = tpu.dynamic_rotate %1 by %c240_i32 dim 1 : vector<8x256xf32>, i32 -> vector<8x256xf32>
    %c7 = arith.constant 7 : index
    %c0_23 = arith.constant 0 : index
    %c0_24 = arith.constant 0 : index
    %34 = vector.load %arg4[%c7, %c0_23, %c0_24] : memref<9x8x256xf32, #tpu.memory_space<vmem>>, vector<1x8x256xf32>
    %35 = vector.shape_cast %34 : vector<1x8x256xf32> to vector<8x256xf32>
    %36 = arith.mulf %33, %35 : vector<8x256xf32>
    %c56 = arith.constant 56 : index
    %c0_25 = arith.constant 0 : index
    %37 = vector.load %arg6[%c56, %c0_25] : memref<72x256xf32, #tpu.memory_space<vmem>>, vector<8x256xf32>
    tpu.vector_store %arg6[%c56, %c0_25], %36 {strides = array<i32>} : memref<72x256xf32, #tpu.memory_space<vmem>>, vector<8x256xf32>,
    %c239_i32 = arith.constant 239 : i32
    %38 = tpu.dynamic_rotate %1 by %c239_i32 dim 1 : vector<8x256xf32>, i32 -> vector<8x256xf32>
    %c8_26 = arith.constant 8 : index
    %c0_27 = arith.constant 0 : index
    %c0_28 = arith.constant 0 : index
    %39 = vector.load %arg4[%c8_26, %c0_27, %c0_28] : memref<9x8x256xf32, #tpu.memory_space<vmem>>, vector<1x8x256xf32>
    %40 = vector.shape_cast %39 : vector<1x8x256xf32> to vector<8x256xf32>
    %41 = arith.mulf %38, %40 : vector<8x256xf32>
    %c64 = arith.constant 64 : index
    %c0_29 = arith.constant 0 : index
    %42 = vector.load %arg6[%c64, %c0_29] : memref<72x256xf32, #tpu.memory_space<vmem>>, vector<8x256xf32>
    tpu.vector_store %arg6[%c64, %c0_29], %41 {strides = array<i32>} : memref<72x256xf32, #tpu.memory_space<vmem>>, vector<8x256xf32>,
    %c0_30 = arith.constant 0 : index
    %c0_31 = arith.constant 0 : index
    %c0_32 = arith.constant 0 : index
    %43 = vector.load %arg2[%c0_30, %c0_31, %c0_32] : memref<2x8x72xf32, #tpu.memory_space<vmem>>, vector<1x8x72xf32>
    %44 = vector.shape_cast %43 : vector<1x8x72xf32> to vector<8x72xf32>
    %c0_33 = arith.constant 0 : index
    %c0_34 = arith.constant 0 : index
    %45 = vector.load %arg6[%c0_33, %c0_34] : memref<72x256xf32, #tpu.memory_space<vmem>>, vector<72x256xf32>
    %cst = arith.constant dense<0.000000e+00> : vector<8x256xf32>
    %46 = tpu.matmul %44, %45, %cst {dimension_numbers = #tpu.dot_dimension_numbers<[1], [0], [0], [1], [0, 0, 1, 1], [], []>} : vector<8x72xf32>, vector<72x256xf32>, vector<8x256xf32> -> vector<8x256xf32>
    %c0_35 = arith.constant 0 : index
    %c0_36 = arith.constant 0 : index
    %c0_37 = arith.constant 0 : index
    %47 = vector.load %arg3[%c0_35, %c0_36, %c0_37] : memref<2x8x1xf32, #tpu.memory_space<vmem>>, vector<1x8x1xf32>
    %48 = vector.shape_cast %47 : vector<1x8x1xf32> to vector<8x1xf32>
    %49 = vector.broadcast %48 : vector<8x1xf32> to vector<8x256xf32>
    %50 = arith.addf %46, %49 : vector<8x256xf32>
    %cst_38 = arith.constant 0.000000e+00 : f32
    %51 = vector.broadcast %cst_38 : f32 to vector<8x256xf32>
    %52 = arith.maximumf %50, %51 : vector<8x256xf32>
    %53 = arith.addf %1, %52 : vector<8x256xf32>
    %c17_i32_39 = arith.constant 17 : i32
    %54 = tpu.dynamic_rotate %53 by %c17_i32_39 dim 1 : vector<8x256xf32>, i32 -> vector<8x256xf32>
    %c0_40 = arith.constant 0 : index
    %c0_41 = arith.constant 0 : index
    %c0_42 = arith.constant 0 : index
    %55 = vector.load %arg4[%c0_40, %c0_41, %c0_42] : memref<9x8x256xf32, #tpu.memory_space<vmem>>, vector<1x8x256xf32>
    %56 = vector.shape_cast %55 : vector<1x8x256xf32> to vector<8x256xf32>
    %57 = arith.mulf %54, %56 : vector<8x256xf32>
    %c0_43 = arith.constant 0 : index
    %c0_44 = arith.constant 0 : index
    %58 = vector.load %arg6[%c0_43, %c0_44] : memref<72x256xf32, #tpu.memory_space<vmem>>, vector<8x256xf32>
    tpu.vector_store %arg6[%c0_43, %c0_44], %57 {strides = array<i32>} : memref<72x256xf32, #tpu.memory_space<vmem>>, vector<8x256xf32>,
    %c16_i32_45 = arith.constant 16 : i32
    %59 = tpu.dynamic_rotate %53 by %c16_i32_45 dim 1 : vector<8x256xf32>, i32 -> vector<8x256xf32>
    %c1_46 = arith.constant 1 : index
    %c0_47 = arith.constant 0 : index
    %c0_48 = arith.constant 0 : index
    %60 = vector.load %arg4[%c1_46, %c0_47, %c0_48] : memref<9x8x256xf32, #tpu.memory_space<vmem>>, vector<1x8x256xf32>
    %61 = vector.shape_cast %60 : vector<1x8x256xf32> to vector<8x256xf32>
    %62 = arith.mulf %59, %61 : vector<8x256xf32>
    %c8_49 = arith.constant 8 : index
    %c0_50 = arith.constant 0 : index
    %63 = vector.load %arg6[%c8_49, %c0_50] : memref<72x256xf32, #tpu.memory_space<vmem>>, vector<8x256xf32>
    tpu.vector_store %arg6[%c8_49, %c0_50], %62 {strides = array<i32>} : memref<72x256xf32, #tpu.memory_space<vmem>>, vector<8x256xf32>,
    %c15_i32_51 = arith.constant 15 : i32
    %64 = tpu.dynamic_rotate %53 by %c15_i32_51 dim 1 : vector<8x256xf32>, i32 -> vector<8x256xf32>
    %c2_52 = arith.constant 2 : index
    %c0_53 = arith.constant 0 : index
    %c0_54 = arith.constant 0 : index
    %65 = vector.load %arg4[%c2_52, %c0_53, %c0_54] : memref<9x8x256xf32, #tpu.memory_space<vmem>>, vector<1x8x256xf32>
    %66 = vector.shape_cast %65 : vector<1x8x256xf32> to vector<8x256xf32>
    %67 = arith.mulf %64, %66 : vector<8x256xf32>
    %c16_55 = arith.constant 16 : index
    %c0_56 = arith.constant 0 : index
    %68 = vector.load %arg6[%c16_55, %c0_56] : memref<72x256xf32, #tpu.memory_space<vmem>>, vector<8x256xf32>
    tpu.vector_store %arg6[%c16_55, %c0_56], %67 {strides = array<i32>} : memref<72x256xf32, #tpu.memory_space<vmem>>, vector<8x256xf32>,
    %c1_i32_57 = arith.constant 1 : i32
    %69 = tpu.dynamic_rotate %53 by %c1_i32_57 dim 1 : vector<8x256xf32>, i32 -> vector<8x256xf32>
    %c3_58 = arith.constant 3 : index
    %c0_59 = arith.constant 0 : index
    %c0_60 = arith.constant 0 : index
    %70 = vector.load %arg4[%c3_58, %c0_59, %c0_60] : memref<9x8x256xf32, #tpu.memory_space<vmem>>, vector<1x8x256xf32>
    %71 = vector.shape_cast %70 : vector<1x8x256xf32> to vector<8x256xf32>
    %72 = arith.mulf %69, %71 : vector<8x256xf32>
    %c24_61 = arith.constant 24 : index
    %c0_62 = arith.constant 0 : index
    %73 = vector.load %arg6[%c24_61, %c0_62] : memref<72x256xf32, #tpu.memory_space<vmem>>, vector<8x256xf32>
    tpu.vector_store %arg6[%c24_61, %c0_62], %72 {strides = array<i32>} : memref<72x256xf32, #tpu.memory_space<vmem>>, vector<8x256xf32>,
    %c32_63 = arith.constant 32 : index
    %c0_64 = arith.constant 0 : index
    %74 = vector.load %arg6[%c32_63, %c0_64] : memref<72x256xf32, #tpu.memory_space<vmem>>, vector<8x256xf32>
    tpu.vector_store %arg6[%c32_63, %c0_64], %53 {strides = array<i32>} : memref<72x256xf32, #tpu.memory_space<vmem>>, vector<8x256xf32>,
    %c255_i32_65 = arith.constant 255 : i32
    %75 = tpu.dynamic_rotate %53 by %c255_i32_65 dim 1 : vector<8x256xf32>, i32 -> vector<8x256xf32>
    %c5_66 = arith.constant 5 : index
    %c0_67 = arith.constant 0 : index
    %c0_68 = arith.constant 0 : index
    %76 = vector.load %arg4[%c5_66, %c0_67, %c0_68] : memref<9x8x256xf32, #tpu.memory_space<vmem>>, vector<1x8x256xf32>
    %77 = vector.shape_cast %76 : vector<1x8x256xf32> to vector<8x256xf32>
    %78 = arith.mulf %75, %77 : vector<8x256xf32>
    %c40_69 = arith.constant 40 : index
    %c0_70 = arith.constant 0 : index
    %79 = vector.load %arg6[%c40_69, %c0_70] : memref<72x256xf32, #tpu.memory_space<vmem>>, vector<8x256xf32>
    tpu.vector_store %arg6[%c40_69, %c0_70], %78 {strides = array<i32>} : memref<72x256xf32, #tpu.memory_space<vmem>>, vector<8x256xf32>,
    %c241_i32_71 = arith.constant 241 : i32
    %80 = tpu.dynamic_rotate %53 by %c241_i32_71 dim 1 : vector<8x256xf32>, i32 -> vector<8x256xf32>
    %c6_72 = arith.constant 6 : index
    %c0_73 = arith.constant 0 : index
    %c0_74 = arith.constant 0 : index
    %81 = vector.load %arg4[%c6_72, %c0_73, %c0_74] : memref<9x8x256xf32, #tpu.memory_space<vmem>>, vector<1x8x256xf32>
    %82 = vector.shape_cast %81 : vector<1x8x256xf32> to vector<8x256xf32>
    %83 = arith.mulf %80, %82 : vector<8x256xf32>
    %c48_75 = arith.constant 48 : index
    %c0_76 = arith.constant 0 : index
    %84 = vector.load %arg6[%c48_75, %c0_76] : memref<72x256xf32, #tpu.memory_space<vmem>>, vector<8x256xf32>
    tpu.vector_store %arg6[%c48_75, %c0_76], %83 {strides = array<i32>} : memref<72x256xf32, #tpu.memory_space<vmem>>, vector<8x256xf32>,
    %c240_i32_77 = arith.constant 240 : i32
    %85 = tpu.dynamic_rotate %53 by %c240_i32_77 dim 1 : vector<8x256xf32>, i32 -> vector<8x256xf32>
    %c7_78 = arith.constant 7 : index
    %c0_79 = arith.constant 0 : index
    %c0_80 = arith.constant 0 : index
    %86 = vector.load %arg4[%c7_78, %c0_79, %c0_80] : memref<9x8x256xf32, #tpu.memory_space<vmem>>, vector<1x8x256xf32>
    %87 = vector.shape_cast %86 : vector<1x8x256xf32> to vector<8x256xf32>
    %88 = arith.mulf %85, %87 : vector<8x256xf32>
    %c56_81 = arith.constant 56 : index
    %c0_82 = arith.constant 0 : index
    %89 = vector.load %arg6[%c56_81, %c0_82] : memref<72x256xf32, #tpu.memory_space<vmem>>, vector<8x256xf32>
    tpu.vector_store %arg6[%c56_81, %c0_82], %88 {strides = array<i32>} : memref<72x256xf32, #tpu.memory_space<vmem>>, vector<8x256xf32>,
    %c239_i32_83 = arith.constant 239 : i32
    %90 = tpu.dynamic_rotate %53 by %c239_i32_83 dim 1 : vector<8x256xf32>, i32 -> vector<8x256xf32>
    %c8_84 = arith.constant 8 : index
    %c0_85 = arith.constant 0 : index
    %c0_86 = arith.constant 0 : index
    %91 = vector.load %arg4[%c8_84, %c0_85, %c0_86] : memref<9x8x256xf32, #tpu.memory_space<vmem>>, vector<1x8x256xf32>
    %92 = vector.shape_cast %91 : vector<1x8x256xf32> to vector<8x256xf32>
    %93 = arith.mulf %90, %92 : vector<8x256xf32>
    %c64_87 = arith.constant 64 : index
    %c0_88 = arith.constant 0 : index
    %94 = vector.load %arg6[%c64_87, %c0_88] : memref<72x256xf32, #tpu.memory_space<vmem>>, vector<8x256xf32>
    tpu.vector_store %arg6[%c64_87, %c0_88], %93 {strides = array<i32>} : memref<72x256xf32, #tpu.memory_space<vmem>>, vector<8x256xf32>,
    %c1_89 = arith.constant 1 : index
    %c0_90 = arith.constant 0 : index
    %c0_91 = arith.constant 0 : index
    %95 = vector.load %arg2[%c1_89, %c0_90, %c0_91] : memref<2x8x72xf32, #tpu.memory_space<vmem>>, vector<1x8x72xf32>
    %96 = vector.shape_cast %95 : vector<1x8x72xf32> to vector<8x72xf32>
    %c0_92 = arith.constant 0 : index
    %c0_93 = arith.constant 0 : index
    %97 = vector.load %arg6[%c0_92, %c0_93] : memref<72x256xf32, #tpu.memory_space<vmem>>, vector<72x256xf32>
    %cst_94 = arith.constant dense<0.000000e+00> : vector<8x256xf32>
    %98 = tpu.matmul %96, %97, %cst_94 {dimension_numbers = #tpu.dot_dimension_numbers<[1], [0], [0], [1], [0, 0, 1, 1], [], []>} : vector<8x72xf32>, vector<72x256xf32>, vector<8x256xf32> -> vector<8x256xf32>
    %c1_95 = arith.constant 1 : index
    %c0_96 = arith.constant 0 : index
    %c0_97 = arith.constant 0 : index
    %99 = vector.load %arg3[%c1_95, %c0_96, %c0_97] : memref<2x8x1xf32, #tpu.memory_space<vmem>>, vector<1x8x1xf32>
    %100 = vector.shape_cast %99 : vector<1x8x1xf32> to vector<8x1xf32>
    %101 = vector.broadcast %100 : vector<8x1xf32> to vector<8x256xf32>
    %102 = arith.addf %98, %101 : vector<8x256xf32>
    %cst_98 = arith.constant 0.000000e+00 : f32
    %103 = vector.broadcast %cst_98 : f32 to vector<8x256xf32>
    %104 = arith.maximumf %102, %103 : vector<8x256xf32>
    %105 = arith.addf %53, %104 : vector<8x256xf32>
    %cst_99 = arith.constant 5.000000e-01 : f32
    %106 = vector.broadcast %cst_99 : f32 to vector<8x256xf32>
    %107 = arith.mulf %106, %105 : vector<8x256xf32>
    %108 = math.tanh %107 : vector<8x256xf32>
    %cst_100 = arith.constant 1.000000e+00 : f32
    %109 = vector.broadcast %cst_100 : f32 to vector<8x256xf32>
    %110 = arith.addf %108, %109 : vector<8x256xf32>
    %cst_101 = arith.constant 5.000000e-01 : f32
    %111 = vector.broadcast %cst_101 : f32 to vector<8x256xf32>
    %112 = arith.mulf %111, %110 : vector<8x256xf32>
    %c0_102 = arith.constant 0 : index
    %c0_103 = arith.constant 0 : index
    %c0_104 = arith.constant 0 : index
    %113 = vector.load %arg5[%c0_102, %c0_103, %c0_104] : memref<1x8x256xf32, #tpu.memory_space<vmem>>, vector<1x8x256xf32>
    %114 = vector.shape_cast %113 : vector<1x8x256xf32> to vector<8x256xf32>
    %115 = vector.shape_cast %112 : vector<8x256xf32> to vector<1x8x256xf32>
    tpu.vector_store %arg5[%c0_102, %c0_103, %c0_104], %115 {strides = array<i32>} : memref<1x8x256xf32, #tpu.memory_space<vmem>>, vector<1x8x256xf32>,
    return
  }
  func.func @transform_0(%arg0: i32) -> (i32, i32, i32) {
    %c0_i32 = arith.constant 0 : i32
    %c0_i32_0 = arith.constant 0 : i32
    %c0_i32_1 = arith.constant 0 : i32
    return %arg0, %c0_i32, %c0_i32_0 : i32, i32, i32
  }
  func.func @transform_1(%arg0: i32) -> (i32, i32, i32) {
    %c0_i32 = arith.constant 0 : i32
    %c0_i32_0 = arith.constant 0 : i32
    %c0_i32_1 = arith.constant 0 : i32
    %c0_i32_2 = arith.constant 0 : i32
    return %c0_i32, %c0_i32_0, %c0_i32_1 : i32, i32, i32
  }
  func.func @transform_2(%arg0: i32) -> (i32, i32, i32) {
    %c0_i32 = arith.constant 0 : i32
    %c0_i32_0 = arith.constant 0 : i32
    %c0_i32_1 = arith.constant 0 : i32
    %c0_i32_2 = arith.constant 0 : i32
    return %c0_i32, %c0_i32_0, %c0_i32_1 : i32, i32, i32
  }
  func.func @transform_3(%arg0: i32) -> (i32, i32, i32) {
    %c0_i32 = arith.constant 0 : i32
    %c0_i32_0 = arith.constant 0 : i32
    %c0_i32_1 = arith.constant 0 : i32
    %c0_i32_2 = arith.constant 0 : i32
    return %c0_i32, %c0_i32_0, %c0_i32_1 : i32, i32, i32
  }
  func.func @transform_4(%arg0: i32) -> (i32, i32, i32) {
    %c0_i32 = arith.constant 0 : i32
    %c0_i32_0 = arith.constant 0 : i32
    %c0_i32_1 = arith.constant 0 : i32
    return %arg0, %c0_i32, %c0_i32_0 : i32, i32, i32
  }
}

</mosaic_0001>

<llo_original>
// kernel: tpu_custom_call.1
$region0: #{tpu_custom_call.1}
  #allocation0 [shape = 'u32[]', space=smem, size = 0x4, offset = 0x4, fixed_abs, tag = 'smem constant byte address 0x4 - core index']
  #allocation1 [shape = 'u32[144,128]{1,0:T(1,128)}', space=vmem, size = 0x12000, scoped, tag = 'internal scratch']
  #allocation2 [shape = 'f32[72,256]{1,0:T(8,128)}', space=vmem, size = 0x12000, scoped, tag = 'scratch operand']
  %s0 = inlined_call_operand.vmem [shape: f32[1,8,256], index: 0, kind: input, shape index: {}]
  %s1 = inlined_call_operand.hbm [shape: f32[2,8,72], index: 1, kind: input, shape index: {}]
  %s2 = inlined_call_operand.vmem [shape: f32[2,8,1], index: 2, kind: input, shape index: {}]
  %s3 = inlined_call_operand.hbm [shape: f32[9,8,256], index: 3, kind: input, shape index: {}]
  %s4 = inlined_call_operand.hbm [shape: f32[1,8,256], index: 4, kind: output, shape index: {}]
  %s5 = sld [smem:[#allocation0]]
  $region34: #{tpu_custom_call.1} parent=0
    _
  %s7 = ssub.s32 1, %s5
  %s8 = scalar_select 0, %s7, %s5
  $region1: #{tpu_custom_call.1} parent=0
    #allocation3 [shape = 'u8[8192]{0}', space=vmem, size = 0x2000, scoped, tag = 'input window, operand 1, single buffered']
    #allocation4 [shape = 's32[1]{0}', space=sflag, size = 0x4, scoped, tag = 'scoped memory for tpu_custom_call.1']
    #allocation5 [shape = 's32[1]{0}', space=sflag, size = 0x4, scoped, tag = 'scoped memory for tpu_custom_call.1']
    #allocation6 [shape = 'u8[73728]{0}', space=vmem, size = 0x12000, scoped, tag = 'input window, operand 3, single buffered']
    #allocation7 [shape = 's32[1]{0}', space=sflag, size = 0x4, scoped, tag = 'scoped memory for tpu_custom_call.1']
    #allocation8 [shape = 'u8[8192]{0}', space=vmem, size = 0x2000, scoped, tag = 'output window, operand 0, single buffered']
    %9 = vsyncpa [#allocation4], 0
    %10 = vsyncpa [#allocation7], 0
    %11 = vsyncpa [#allocation5], 0
    // Predicated region
    $region2: #{tpu_custom_call.1} parent=1 // pred_check
      _
    $region3: #{tpu_custom_call.1} parent=1 // pred_check_branch
      %13 = sbr.rel (0) target = $region5
    $region4: #{tpu_custom_call.1} parent=1 // pred_region
      _
    $region5: #{tpu_custom_call.1} parent=1 // pred_fallthru
      _
    // Predicated region
    $region6: #{tpu_custom_call.1} parent=1 // pred_check
      _
    $region7: #{tpu_custom_call.1} parent=1 // pred_check_branch
      %15 = sbr.rel (0) target = $region9
    $region8: #{tpu_custom_call.1} parent=1 // pred_region
      %s17 = ssub.s32 256, 256
      %18 = vsyncadd [#allocation4], %s17
      %s19 = sshll.u32 [#allocation3], 4
      %s20 = int_to_ptr.vmem [resolvable:$true] %s19
      %25 = dma.hbm_to_vmem [thread:$0]  %s1, 256, %s20, [#allocation4], 128, 128, 8
    $region9: #{tpu_custom_call.1} parent=1 // pred_fallthru
      _
    // Predicated region
    $region10: #{tpu_custom_call.1} parent=1 // pred_check
      _
    $region11: #{tpu_custom_call.1} parent=1 // pred_check_branch
      %27 = sbr.rel (0) target = $region13
    $region12: #{tpu_custom_call.1} parent=1 // pred_region
      _
    $region13: #{tpu_custom_call.1} parent=1 // pred_fallthru
      _
    // Predicated region
    $region14: #{tpu_custom_call.1} parent=1 // pred_check
      _
    $region15: #{tpu_custom_call.1} parent=1 // pred_check_branch
      %29 = sbr.rel (0) target = $region17
    $region16: #{tpu_custom_call.1} parent=1 // pred_region
      %s31 = ssub.s32 2304, 2304
      %32 = vsyncadd [#allocation7], %s31
      %s33 = sshll.u32 [#allocation6], 4
      %s34 = int_to_ptr.vmem [resolvable:$true] %s33
      %39 = dma.hbm_to_vmem [thread:$0]  %s3, 2304, %s34, [#allocation7], 256, 256, 16
    $region17: #{tpu_custom_call.1} parent=1 // pred_fallthru
      _
    // Predicated region
    $region18: #{tpu_custom_call.1} parent=1 // pred_check
      _
    $region19: #{tpu_custom_call.1} parent=1 // pred_check_branch
      %41 = sbr.rel (0) target = $region21
    $region20: #{tpu_custom_call.1} parent=1 // pred_region
      %42 = dma.done [#allocation4], 256
    $region21: #{tpu_custom_call.1} parent=1 // pred_fallthru
      _
    // Predicated region
    $region22: #{tpu_custom_call.1} parent=1 // pred_check
      _
    $region23: #{tpu_custom_call.1} parent=1 // pred_check_branch
      %44 = sbr.rel (0) target = $region25
    $region24: #{tpu_custom_call.1} parent=1 // pred_region
      %45 = dma.done [#allocation7], 2304
    $region25: #{tpu_custom_call.1} parent=1 // pred_fallthru
      _
    %v46 = vld [vmem:[%s0] sm:$0xff]
    %v47 = vld [vmem:[%s0 + $0x8] sm:$0xff]
    %48 = vrot.lane.b32.xlu0 %v46, 17
    %v49 = vpop.permute.xlu0 %48
    %50 = vrot.lane.b32.xlu0 %v47, 17
    %v51 = vpop.permute.xlu0 %50
    %v52 = vlaneseq
    %v53 = vand.u32 %v52, 127
    %vm54 = vcmp.lt.s32.totalorder %v53, 17
    %v55 = vsel %vm54, %v49, %v51
    %v56 = vsel %vm54, %v51, %v49
    %v57 = vld [vmem:[#allocation6] sm:$0xff]
    %v58 = vld [vmem:[#allocation6 + $0x8] sm:$0xff]
    %v59 = vmul.f32 %v56, %v57
    %v60 = vmul.f32 %v55, %v58
    %61 = vst [vmem:[#allocation2] sm:$0xff] %v59
    %62 = vst [vmem:[#allocation2 + $0x8] sm:$0xff] %v60
    %63 = vrot.lane.b32.xlu0 %v46, 16
    %v64 = vpop.permute.xlu0 %63
    %65 = vrot.lane.b32.xlu0 %v47, 16
    %v66 = vpop.permute.xlu0 %65
    %vm67 = vcmp.lt.s32.totalorder %v53, 16
    %v68 = vsel %vm67, %v64, %v66
    %v69 = vsel %vm67, %v66, %v64
    %s70 = scalar_lea.vmem [#allocation6], 16
    %v71 = vld [vmem:[%s70] sm:$0xff]
    %v72 = vld [vmem:[%s70 + $0x8] sm:$0xff]
    %v73 = vmul.f32 %v69, %v71
    %v74 = vmul.f32 %v68, %v72
    %75 = vst [vmem:[#allocation2 + $0x10] sm:$0xff] %v73
    %76 = vst [vmem:[#allocation2 + $0x18] sm:$0xff] %v74
    %77 = vrot.lane.b32.xlu0 %v46, 15
    %v78 = vpop.permute.xlu0 %77
    %79 = vrot.lane.b32.xlu0 %v47, 15
    %v80 = vpop.permute.xlu0 %79
    %vm81 = vcmp.lt.s32.totalorder %v53, 15
    %v82 = vsel %vm81, %v78, %v80
    %v83 = vsel %vm81, %v80, %v78
    %s84 = scalar_lea.vmem [#allocation6], 32
    %v85 = vld [vmem:[%s84] sm:$0xff]
    %v86 = vld [vmem:[%s84 + $0x8] sm:$0xff]
    %v87 = vmul.f32 %v83, %v85
    %v88 = vmul.f32 %v82, %v86
    %89 = vst [vmem:[#allocation2 + $0x20] sm:$0xff] %v87
    %90 = vst [vmem:[#allocation2 + $0x28] sm:$0xff] %v88
    %91 = vrot.lane.b32.xlu0 %v46, 1
    %v92 = vpop.permute.xlu0 %91
    %93 = vrot.lane.b32.xlu0 %v47, 1
    %v94 = vpop.permute.xlu0 %93
    %vm95 = vcmp.lt.s32.totalorder %v53, 1
    %v96 = vsel %vm95, %v92, %v94
    %v97 = vsel %vm95, %v94, %v92
    %s98 = scalar_lea.vmem [#allocation6], 48
    %v99 = vld [vmem:[%s98] sm:$0xff]
    %v100 = vld [vmem:[%s98 + $0x8] sm:$0xff]
    %v101 = vmul.f32 %v97, %v99
    %v102 = vmul.f32 %v96, %v100
    %103 = vst [vmem:[#allocation2 + $0x30] sm:$0xff] %v101
    %104 = vst [vmem:[#allocation2 + $0x38] sm:$0xff] %v102
    %105 = vst [vmem:[#allocation2 + $0x40] sm:$0xff] %v46
    %106 = vst [vmem:[#allocation2 + $0x48] sm:$0xff] %v47
    %107 = vrot.lane.b32.xlu0 %v46, 127
    %v108 = vpop.permute.xlu0 %107
    %109 = vrot.lane.b32.xlu0 %v47, 127
    %v110 = vpop.permute.xlu0 %109
    %vm111 = vcmp.lt.s32.totalorder %v53, 127
    %v112 = vsel %vm111, %v108, %v110
    %v113 = vsel %vm111, %v110, %v108
    %s114 = scalar_lea.vmem [#allocation6], 80
    %v115 = vld [vmem:[%s114] sm:$0xff]
    %v116 = vld [vmem:[%s114 + $0x8] sm:$0xff]
    %v117 = vmul.f32 %v112, %v115
    %v118 = vmul.f32 %v113, %v116
    %119 = vst [vmem:[#allocation2 + $0x50] sm:$0xff] %v117
    %120 = vst [vmem:[#allocation2 + $0x58] sm:$0xff] %v118
    %121 = vrot.lane.b32.xlu0 %v46, 113
    %v122 = vpop.permute.xlu0 %121
    %123 = vrot.lane.b32.xlu0 %v47, 113
    %v124 = vpop.permute.xlu0 %123
    %vm125 = vcmp.lt.s32.totalorder %v53, 113
    %v126 = vsel %vm125, %v122, %v124
    %v127 = vsel %vm125, %v124, %v122
    %s128 = scalar_lea.vmem [#allocation6], 96
    %v129 = vld [vmem:[%s128] sm:$0xff]
    %v130 = vld [vmem:[%s128 + $0x8] sm:$0xff]
    %v131 = vmul.f32 %v126, %v129
    %v132 = vmul.f32 %v127, %v130
    %133 = vst [vmem:[#allocation2 + $0x60] sm:$0xff] %v131
    %134 = vst [vmem:[#allocation2 + $0x68] sm:$0xff] %v132
    %135 = vrot.lane.b32.xlu0 %v46, 112
    %v136 = vpop.permute.xlu0 %135
    %137 = vrot.lane.b32.xlu0 %v47, 112
    %v138 = vpop.permute.xlu0 %137
    %vm139 = vcmp.lt.s32.totalorder %v53, 112
    %v140 = vsel %vm139, %v136, %v138
    %v141 = vsel %vm139, %v138, %v136
    %s142 = scalar_lea.vmem [#allocation6], 112
    %v143 = vld [vmem:[%s142] sm:$0xff]
    %v144 = vld [vmem:[%s142 + $0x8] sm:$0xff]
    %v145 = vmul.f32 %v140, %v143
    %v146 = vmul.f32 %v141, %v144
    %147 = vst [vmem:[#allocation2 + $0x70] sm:$0xff] %v145
    %148 = vst [vmem:[#allocation2 + $0x78] sm:$0xff] %v146
    %149 = vrot.lane.b32.xlu0 %v46, 111
    %v150 = vpop.permute.xlu0 %149
    %151 = vrot.lane.b32.xlu0 %v47, 111
    %v152 = vpop.permute.xlu0 %151
    %vm153 = vcmp.lt.s32.totalorder %v53, 111
    %v154 = vsel %vm153, %v150, %v152
    %v155 = vsel %vm153, %v152, %v150
    %s156 = scalar_lea.vmem [#allocation6], 128
    %v157 = vld [vmem:[%s156] sm:$0xff]
    %v158 = vld [vmem:[%s156 + $0x8] sm:$0xff]
    %v159 = vmul.f32 %v154, %v157
    %v160 = vmul.f32 %v155, %v158
    %161 = vst [vmem:[#allocation2 + $0x80] sm:$0xff] %v159
    %162 = vst [vmem:[#allocation2 + $0x88] sm:$0xff] %v160
    %v163 = vld [vmem:[#allocation3] sm:$0xff]
    %v164 = vld [vmem:[#allocation2] sm:$0xff]
    %v165 = vld [vmem:[#allocation2 + $0x8] sm:$0xff]
    %v166 = vld [vmem:[#allocation2 + $0x10] sm:$0xff]
    %v167 = vld [vmem:[#allocation2 + $0x18] sm:$0xff]
    %v168 = vld [vmem:[#allocation2 + $0x20] sm:$0xff]
    %v169 = vld [vmem:[#allocation2 + $0x28] sm:$0xff]
    %v170 = vld [vmem:[#allocation2 + $0x30] sm:$0xff]
    %v171 = vld [vmem:[#allocation2 + $0x38] sm:$0xff]
    %v172 = vld [vmem:[#allocation2 + $0x40] sm:$0xff]
    %v173 = vld [vmem:[#allocation2 + $0x48] sm:$0xff]
    %v174 = vld [vmem:[#allocation2 + $0x50] sm:$0xff]
    %v175 = vld [vmem:[#allocation2 + $0x58] sm:$0xff]
    %v176 = vld [vmem:[#allocation2 + $0x60] sm:$0xff]
    %v177 = vld [vmem:[#allocation2 + $0x68] sm:$0xff]
    %v178 = vld [vmem:[#allocation2 + $0x70] sm:$0xff]
    %v179 = vld [vmem:[#allocation2 + $0x78] sm:$0xff]
    %v180 = vld [vmem:[#allocation2 + $0x80] sm:$0xff]
    %v181 = vld [vmem:[#allocation2 + $0x88] sm:$0xff]
    %v182 = vld [vmem:[%s2] sm:$0xff]
    %184 = vset.pattern.permute.xlu0 0
    %185 = vperm.xlu0 %184, %v182
    %v186 = vpop.permute.xlu0 %185
    %vm188 = vcmask 588800
    %v190 = vsel %vm188, %v163, 0
    %192 = vmatprep.subr.mxu0 %v165
    %193 = vmatpush1.msra.mxu0 %v164
    %194 = vmatprep.subr.mxu0 %v167
    %195 = vmatpush1.msra.mxu0 %v166
    %196 = vmatprep.subr.mxu0 %v169
    %197 = vmatpush1.msra.mxu0 %v168
    %198 = vmatprep.subr.mxu0 %v171
    %199 = vmatpush1.msra.mxu0 %v170
    %200 = vmatprep.subr.mxu0 %v173
    %201 = vmatpush1.msra.mxu0 %v172
    %202 = vmatprep.subr.mxu0 %v175
    %203 = vmatpush1.msra.mxu0 %v174
    %204 = vmatprep.subr.mxu0 %v177
    %205 = vmatpush1.msra.mxu0 %v176
    %206 = vmatprep.subr.mxu0 %v179
    %207 = vmatpush1.msra.mxu0 %v178
    %208 = vmatprep.subr.mxu0 %v181
    %209 = vmatpush1.msra.mxu0 %v180
    %210 = vmatprep.subr.mxu0 0.0
    %211 = vmatpush1.msra.mxu0 0.0
    %212 = vmatprep.subr.mxu0 0.0
    %213 = vmatpush1.msra.mxu0 0.0
    %214 = vmatprep.subr.mxu0 0.0
    %215 = vmatpush1.msra.mxu0 0.0
    %216 = vmatprep.subr.mxu0 0.0
    %217 = vmatpush1.msra.mxu0 0.0
    %218 = vmatprep.subr.mxu0 0.0
    %219 = vmatpush1.msra.mxu0 0.0
    %220 = vmatprep.subr.mxu0 0.0
    %221 = vmatpush1.msra.mxu0 0.0
    %222 = vmatprep.subr.mxu0 0.0
    %223 = vmatpush1.msra.mxu0 0.0
    %224 = vmatprep.subr.mxu0 0.0
    %225 = vmatpush1.msra.mxu0 0.0
    %226 = vmatprep.subr.mxu0 0.0
    %227 = vmatpush1.msra.mxu0 0.0
    %228 = vmatprep.subr.mxu0 0.0
    %229 = vmatpush1.msra.mxu0 0.0
    %230 = vmatprep.subr.mxu0 0.0
    %231 = vmatpush1.msra.mxu0 0.0
    %232 = vmatprep.subr.mxu0 0.0
    %233 = vmatpush1.msra.mxu0 0.0
    %234 = vmatprep.subr.mxu0 0.0
    %235 = vmatpush1.msra.mxu0 0.0
    %236 = vmatprep.subr.mxu0 0.0
    %237 = vmatpush1.msra.mxu0 0.0
    %238 = vmatprep.subr.mxu0 0.0
    %239 = vmatpush1.msra.mxu0 0.0
    %240 = vmatprep.subr.mxu0 0.0
    %241 = vmatpush1.msra.mxu0 0.0
    %242 = vmatprep.subr.mxu0 0.0
    %243 = vmatpush1.msra.mxu0 0.0
    %244 = vmatprep.subr.mxu0 0.0
    %245 = vmatpush1.msra.mxu0 0.0
    %246 = vmatprep.subr.mxu0 0.0
    %247 = vmatpush1.msra.mxu0 0.0
    %248 = vmatprep.subr.mxu0 0.0
    %249 = vmatpush1.msra.mxu0 0.0
    %250 = vmatprep.subr.mxu0 0.0
    %251 = vmatpush1.msra.mxu0 0.0
    %252 = vmatprep.subr.mxu0 0.0
    %253 = vmatpush1.msra.mxu0 0.0
    %254 = vmatprep.subr.mxu0 0.0
    %255 = vmatpush1.msra.mxu0 0.0
    %256 = vmatprep.mubr.f32.mxu0 0.0
    %257 = vmatmul.mubr.f32.gmra.mrb[0].mxu0 %v190
    %v258 = vpop.f32.mrb[0].mxu0
    %v259 = vadd.f32 %v186, %v258
    %v260 = vpop.f32.mrb[0].mxu0
    %v261 = vadd.f32 %v186, %v260
    %262 = vdwg.mxu0
    %v263 = vmax.f32 %v259, 0.0
    %v264 = vmax.f32 %v261, 0.0
    %v265 = vadd.f32 %v46, %v263
    %v266 = vadd.f32 %v47, %v264
    %267 = vrot.lane.b32.xlu0 %v265, 17
    %v268 = vpop.permute.xlu0 %267
    %269 = vrot.lane.b32.xlu0 %v266, 17
    %v270 = vpop.permute.xlu0 %269
    %v271 = vsel %vm54, %v268, %v270
    %v272 = vsel %vm54, %v270, %v268
    %v273 = vld [vmem:[#allocation6] sm:$0xff]
    %v274 = vld [vmem:[#allocation6 + $0x8] sm:$0xff]
    %v275 = vmul.f32 %v272, %v273
    %v276 = vmul.f32 %v271, %v274
    %277 = vst [vmem:[#allocation2] sm:$0xff] %v275
    %278 = vst [vmem:[#allocation2 + $0x8] sm:$0xff] %v276
    %279 = vrot.lane.b32.xlu0 %v265, 16
    %v280 = vpop.permute.xlu0 %279
    %281 = vrot.lane.b32.xlu0 %v266, 16
    %v282 = vpop.permute.xlu0 %281
    %v283 = vsel %vm67, %v280, %v282
    %v284 = vsel %vm67, %v282, %v280
    %v285 = vld [vmem:[%s70] sm:$0xff]
    %v286 = vld [vmem:[%s70 + $0x8] sm:$0xff]
    %v287 = vmul.f32 %v284, %v285
    %v288 = vmul.f32 %v283, %v286
    %289 = vst [vmem:[#allocation2 + $0x10] sm:$0xff] %v287
    %290 = vst [vmem:[#allocation2 + $0x18] sm:$0xff] %v288
    %291 = vrot.lane.b32.xlu0 %v265, 15
    %v292 = vpop.permute.xlu0 %291
    %293 = vrot.lane.b32.xlu0 %v266, 15
    %v294 = vpop.permute.xlu0 %293
    %v295 = vsel %vm81, %v292, %v294
    %v296 = vsel %vm81, %v294, %v292
    %v297 = vld [vmem:[%s84] sm:$0xff]
    %v298 = vld [vmem:[%s84 + $0x8] sm:$0xff]
    %v299 = vmul.f32 %v296, %v297
    %v300 = vmul.f32 %v295, %v298
    %301 = vst [vmem:[#allocation2 + $0x20] sm:$0xff] %v299
    %302 = vst [vmem:[#allocation2 + $0x28] sm:$0xff] %v300
    %303 = vrot.lane.b32.xlu0 %v265, 1
    %v304 = vpop.permute.xlu0 %303
    %305 = vrot.lane.b32.xlu0 %v266, 1
    %v306 = vpop.permute.xlu0 %305
    %v307 = vsel %vm95, %v304, %v306
    %v308 = vsel %vm95, %v306, %v304
    %v309 = vld [vmem:[%s98] sm:$0xff]
    %v310 = vld [vmem:[%s98 + $0x8] sm:$0xff]
    %v311 = vmul.f32 %v308, %v309
    %v312 = vmul.f32 %v307, %v310
    %313 = vst [vmem:[#allocation2 + $0x30] sm:$0xff] %v311
    %314 = vst [vmem:[#allocation2 + $0x38] sm:$0xff] %v312
    %315 = vst [vmem:[#allocation2 + $0x40] sm:$0xff] %v265
    %316 = vst [vmem:[#allocation2 + $0x48] sm:$0xff] %v266
    %317 = vrot.lane.b32.xlu0 %v265, 127
    %v318 = vpop.permute.xlu0 %317
    %319 = vrot.lane.b32.xlu0 %v266, 127
    %v320 = vpop.permute.xlu0 %319
    %v321 = vsel %vm111, %v318, %v320
    %v322 = vsel %vm111, %v320, %v318
    %v323 = vld [vmem:[%s114] sm:$0xff]
    %v324 = vld [vmem:[%s114 + $0x8] sm:$0xff]
    %v325 = vmul.f32 %v321, %v323
    %v326 = vmul.f32 %v322, %v324
    %327 = vst [vmem:[#allocation2 + $0x50] sm:$0xff] %v325
    %328 = vst [vmem:[#allocation2 + $0x58] sm:$0xff] %v326
    %329 = vrot.lane.b32.xlu0 %v265, 113
    %v330 = vpop.permute.xlu0 %329
    %331 = vrot.lane.b32.xlu0 %v266, 113
    %v332 = vpop.permute.xlu0 %331
    %v333 = vsel %vm125, %v330, %v332
    %v334 = vsel %vm125, %v332, %v330
    %v335 = vld [vmem:[%s128] sm:$0xff]
    %v336 = vld [vmem:[%s128 + $0x8] sm:$0xff]
    %v337 = vmul.f32 %v333, %v335
    %v338 = vmul.f32 %v334, %v336
    %339 = vst [vmem:[#allocation2 + $0x60] sm:$0xff] %v337
    %340 = vst [vmem:[#allocation2 + $0x68] sm:$0xff] %v338
    %341 = vrot.lane.b32.xlu0 %v265, 112
    %v342 = vpop.permute.xlu0 %341
    %343 = vrot.lane.b32.xlu0 %v266, 112
    %v344 = vpop.permute.xlu0 %343
    %v345 = vsel %vm139, %v342, %v344
    %v346 = vsel %vm139, %v344, %v342
    %v347 = vld [vmem:[%s142] sm:$0xff]
    %v348 = vld [vmem:[%s142 + $0x8] sm:$0xff]
    %v349 = vmul.f32 %v345, %v347
    %v350 = vmul.f32 %v346, %v348
    %351 = vst [vmem:[#allocation2 + $0x70] sm:$0xff] %v349
    %352 = vst [vmem:[#allocation2 + $0x78] sm:$0xff] %v350
    %353 = vrot.lane.b32.xlu0 %v265, 111
    %v354 = vpop.permute.xlu0 %353
    %355 = vrot.lane.b32.xlu0 %v266, 111
    %v356 = vpop.permute.xlu0 %355
    %v357 = vsel %vm153, %v354, %v356
    %v358 = vsel %vm153, %v356, %v354
    %v359 = vld [vmem:[%s156] sm:$0xff]
    %v360 = vld [vmem:[%s156 + $0x8] sm:$0xff]
    %v361 = vmul.f32 %v357, %v359
    %v362 = vmul.f32 %v358, %v360
    %363 = vst [vmem:[#allocation2 + $0x80] sm:$0xff] %v361
    %364 = vst [vmem:[#allocation2 + $0x88] sm:$0xff] %v362
    %s365 = scalar_lea.vmem [#allocation3], 8
    %v366 = vld [vmem:[%s365] sm:$0xff]
    %v367 = vld [vmem:[#allocation2] sm:$0xff]
    %v368 = vld [vmem:[#allocation2 + $0x8] sm:$0xff]
    %v369 = vld [vmem:[#allocation2 + $0x10] sm:$0xff]
    %v370 = vld [vmem:[#allocation2 + $0x18] sm:$0xff]
    %v371 = vld [vmem:[#allocation2 + $0x20] sm:$0xff]
    %v372 = vld [vmem:[#allocation2 + $0x28] sm:$0xff]
    %v373 = vld [vmem:[#allocation2 + $0x30] sm:$0xff]
    %v374 = vld [vmem:[#allocation2 + $0x38] sm:$0xff]
    %v375 = vld [vmem:[#allocation2 + $0x40] sm:$0xff]
    %v376 = vld [vmem:[#allocation2 + $0x48] sm:$0xff]
    %v377 = vld [vmem:[#allocation2 + $0x50] sm:$0xff]
    %v378 = vld [vmem:[#allocation2 + $0x58] sm:$0xff]
    %v379 = vld [vmem:[#allocation2 + $0x60] sm:$0xff]
    %v380 = vld [vmem:[#allocation2 + $0x68] sm:$0xff]
    %v381 = vld [vmem:[#allocation2 + $0x70] sm:$0xff]
    %v382 = vld [vmem:[#allocation2 + $0x78] sm:$0xff]
    %v383 = vld [vmem:[#allocation2 + $0x80] sm:$0xff]
    %v384 = vld [vmem:[#allocation2 + $0x88] sm:$0xff]
    %s385 = scalar_lea.vmem %s2, 8
    %v386 = vld [vmem:[%s385] sm:$0xff]
    %388 = vset.pattern.permute.xlu0 0
    %389 = vperm.xlu0 %388, %v386
    %v390 = vpop.permute.xlu0 %389
    %v393 = vsel %vm188, %v366, 0
    %395 = vmatprep.subr.mxu0 %v368
    %396 = vmatpush1.msra.mxu0 %v367
    %397 = vmatprep.subr.mxu0 %v370
    %398 = vmatpush1.msra.mxu0 %v369
    %399 = vmatprep.subr.mxu0 %v372
    %400 = vmatpush1.msra.mxu0 %v371
    %401 = vmatprep.subr.mxu0 %v374
    %402 = vmatpush1.msra.mxu0 %v373
    %403 = vmatprep.subr.mxu0 %v376
    %404 = vmatpush1.msra.mxu0 %v375
    %405 = vmatprep.subr.mxu0 %v378
    %406 = vmatpush1.msra.mxu0 %v377
    %407 = vmatprep.subr.mxu0 %v380
    %408 = vmatpush1.msra.mxu0 %v379
    %409 = vmatprep.subr.mxu0 %v382
    %410 = vmatpush1.msra.mxu0 %v381
    %411 = vmatprep.subr.mxu0 %v384
    %412 = vmatpush1.msra.mxu0 %v383
    %413 = vmatprep.subr.mxu0 0.0
    %414 = vmatpush1.msra.mxu0 0.0
    %415 = vmatprep.subr.mxu0 0.0
    %416 = vmatpush1.msra.mxu0 0.0
    %417 = vmatprep.subr.mxu0 0.0
    %418 = vmatpush1.msra.mxu0 0.0
    %419 = vmatprep.subr.mxu0 0.0
    %420 = vmatpush1.msra.mxu0 0.0
    %421 = vmatprep.subr.mxu0 0.0
    %422 = vmatpush1.msra.mxu0 0.0
    %423 = vmatprep.subr.mxu0 0.0
    %424 = vmatpush1.msra.mxu0 0.0
    %425 = vmatprep.subr.mxu0 0.0
    %426 = vmatpush1.msra.mxu0 0.0
    %427 = vmatprep.subr.mxu0 0.0
    %428 = vmatpush1.msra.mxu0 0.0
    %429 = vmatprep.subr.mxu0 0.0
    %430 = vmatpush1.msra.mxu0 0.0
    %431 = vmatprep.subr.mxu0 0.0
    %432 = vmatpush1.msra.mxu0 0.0
    %433 = vmatprep.subr.mxu0 0.0
    %434 = vmatpush1.msra.mxu0 0.0
    %435 = vmatprep.subr.mxu0 0.0
    %436 = vmatpush1.msra.mxu0 0.0
    %437 = vmatprep.subr.mxu0 0.0
    %438 = vmatpush1.msra.mxu0 0.0
    %439 = vmatprep.subr.mxu0 0.0
    %440 = vmatpush1.msra.mxu0 0.0
    %441 = vmatprep.subr.mxu0 0.0
    %442 = vmatpush1.msra.mxu0 0.0
    %443 = vmatprep.subr.mxu0 0.0
    %444 = vmatpush1.msra.mxu0 0.0
    %445 = vmatprep.subr.mxu0 0.0
    %446 = vmatpush1.msra.mxu0 0.0
    %447 = vmatprep.subr.mxu0 0.0
    %448 = vmatpush1.msra.mxu0 0.0
    %449 = vmatprep.subr.mxu0 0.0
    %450 = vmatpush1.msra.mxu0 0.0
    %451 = vmatprep.subr.mxu0 0.0
    %452 = vmatpush1.msra.mxu0 0.0
    %453 = vmatprep.subr.mxu0 0.0
    %454 = vmatpush1.msra.mxu0 0.0
    %455 = vmatprep.subr.mxu0 0.0
    %456 = vmatpush1.msra.mxu0 0.0
    %457 = vmatprep.subr.mxu0 0.0
    %458 = vmatpush1.msra.mxu0 0.0
    %459 = vmatprep.mubr.f32.mxu0 0.0
    %460 = vmatmul.mubr.f32.gmra.mrb[0].mxu0 %v393
    %v461 = vpop.f32.mrb[0].mxu0
    %v462 = vadd.f32 %v390, %v461
    %v463 = vpop.f32.mrb[0].mxu0
    %v464 = vadd.f32 %v390, %v463
    %465 = vdwg.mxu0
    %v466 = vmax.f32 %v462, 0.0
    %v467 = vmax.f32 %v464, 0.0
    %v468 = vadd.f32 %v265, %v466
    %v469 = vadd.f32 %v266, %v467
    %v470 = vmul.f32 %v468, 0.5
    %v471 = vmul.f32 %v469, 0.5
    %v472 = vtanh.pop %v470
    %v473 = vtanh.pop %v471
    %v474 = vadd.f32 %v472, 1.0
    %v475 = vadd.f32 %v473, 1.0
    %v476 = vmul.f32 %v474, 0.5
    %v477 = vmul.f32 %v475, 0.5
    %478 = vst [vmem:[#allocation8] sm:$0xff] %v476
    %479 = vst [vmem:[#allocation8 + $0x8] sm:$0xff] %v477
    // Predicated region
    $region26: #{tpu_custom_call.1} parent=1 // pred_check
      _
    $region27: #{tpu_custom_call.1} parent=1 // pred_check_branch
      %481 = sbr.rel (0) target = $region29
    $region28: #{tpu_custom_call.1} parent=1 // pred_region
      %s483 = ssub.s32 256, 256
      %484 = vsyncadd [#allocation5], %s483
      %s486 = sshll.u32 [#allocation8], 4
      %s487 = int_to_ptr.vmem [resolvable:$true] %s486
      %489 = dma.vmem_to_hbm [thread:$0]  %s487, 256, %s4, [#allocation5]
    $region29: #{tpu_custom_call.1} parent=1 // pred_fallthru
      _
    // Predicated region
    $region30: #{tpu_custom_call.1} parent=1 // pred_check
      _
    $region31: #{tpu_custom_call.1} parent=1 // pred_check_branch
      %491 = sbr.rel (0) target = $region33
    $region32: #{tpu_custom_call.1} parent=1 // pred_region
      %492 = dma.done [#allocation5], 256
    $region33: #{tpu_custom_call.1} parent=1 // pred_fallthru
      _
    %493 = vsyncpa [#allocation4], 1
    %494 = vsyncpa [#allocation7], 1
    %495 = vsyncpa [#allocation5], 1

</llo_original>
